<compile_context>
chip_gen: v7x
topology: tpu7x:2x2x1
jax: 0.10.0
libtpu: 0.0.40
codegen_flags: <defaults>
</compile_context>

<pallas_src>
import functools

import jax
import jax.numpy as jnp
from jax.experimental import pallas as pl
from jax.experimental.pallas import tpu as pltpu


def _round_up(a, b):
    return (a + b - 1) // b * b


def _hcr_kernel(xT_ref, tT_ref, loss_ref, acc_ref, *, n_rows, n_cls, row_tile):
    i = pl.program_id(0)

    @pl.when(i == 0)
    def _():
        acc_ref[...] = jnp.zeros_like(acc_ref)

    # [C_pad, T]: classes on sublanes, rows on lanes (full 128-lane occupancy).
    x = xT_ref[...].astype(jnp.float32)
    t = tT_ref[...].astype(jnp.float32)
    c_pad, tile = x.shape

    # class-validity mask (classes padded up to a multiple of 8 contribute nothing)
    cls_ids = jax.lax.broadcasted_iota(jnp.int32, (c_pad, tile), 0)
    cls_valid = (cls_ids < n_cls).astype(jnp.float32)

    pos_m = t * cls_valid            # [C_pad, T]
    neg_m = (1.0 - t) * cls_valid    # [C_pad, T]

    # Pairwise hinge: A[j, b] = sum_k pos_m[k,b] * relu(1 + x[j,b] - x[k,b]).
    # Static unroll over the real classes; each iteration is pure [C_pad, T] VPU work.
    acc_pair = jnp.zeros_like(x)
    for k in range(n_cls):
        xk = x[k : k + 1, :]          # [1, T]
        pk = pos_m[k : k + 1, :]      # [1, T]
        acc_pair = acc_pair + pk * jnp.maximum(x - (xk - 1.0), 0.0)

    # Per-row reductions (sublane axis), all [1, T].
    hinge_sum = jnp.sum(neg_m * acc_pair, axis=0, keepdims=True)
    neg_sum = jnp.sum(neg_m * jnp.maximum(1.0 + x, 0.0), axis=0, keepdims=True)
    pos_sum = jnp.sum(pos_m * jnp.maximum(1.0 - x, 0.0), axis=0, keepdims=True)
    p_cnt = jnp.sum(pos_m, axis=0, keepdims=True)
    q_cnt = jnp.sum(neg_m, axis=0, keepdims=True)

    neg_calib = neg_sum / jnp.maximum(q_cnt, 1.0)
    pos_calib = pos_sum / jnp.maximum(p_cnt, 1.0)
    # P == 0 branch of the torch code: hinge reduces to mean_j relu(1 + n_j) = neg_calib.
    l_hinge = jnp.where(
        p_cnt > 0.0, hinge_sum / jnp.maximum(p_cnt * q_cnt, 1.0), neg_calib
    )

    row_loss = l_hinge + neg_calib + pos_calib   # [1, T]

    # mask out padded rows
    row_ids = i * row_tile + jax.lax.broadcasted_iota(jnp.int32, (1, tile), 1)
    row_valid = (row_ids < n_rows).astype(jnp.float32)

    acc_ref[...] += row_loss * row_valid

    @pl.when(i == pl.num_programs(0) - 1)
    def _():
        loss_ref[...] = jnp.sum(acc_ref[...], keepdims=True) / jnp.float32(n_rows)


def hinge_calibrated_ranking_loss(outputs, targets, row_tile=256):
    """outputs: [N, ...], targets (0/1): same shape. Returns scalar f32 loss."""
    assert outputs.shape == targets.shape
    n = outputs.shape[0]
    x2d = outputs.reshape(n, -1)
    t2d = targets.reshape(n, -1)
    c = x2d.shape[1]

    row_tile = max(128, _round_up(row_tile, 128))
    tile = min(row_tile, _round_up(n, 128))       # don't over-tile tiny batches
    n_pad = _round_up(n, tile)
    c_pad = _round_up(c, 8)

    x_p = jnp.pad(x2d, ((0, n_pad - n), (0, c_pad - c)))
    t_p = jnp.pad(t2d, ((0, n_pad - n), (0, c_pad - c)))

    # Transpose once in the wrapper: rows -> lane dim, classes -> sublane dim.
    xT = x_p.T                                    # [C_pad, N_pad]
    tT = t_p.T                                    # [C_pad, N_pad] (natural dtype)

    kernel = functools.partial(_hcr_kernel, n_rows=n, n_cls=c, row_tile=tile)

    loss = pl.pallas_call(
        kernel,
        out_shape=jax.ShapeDtypeStruct((1, 1), jnp.float32),
        grid_spec=pltpu.PrefetchScalarGridSpec(
            num_scalar_prefetch=0,
            grid=(n_pad // tile,),
            in_specs=[
                pl.BlockSpec((c_pad, tile), lambda i: (0, i)),
                pl.BlockSpec((c_pad, tile), lambda i: (0, i)),
            ],
            out_specs=pl.BlockSpec((1, 1), lambda i: (0, 0)),
            scratch_shapes=[pltpu.VMEM((1, tile), jnp.float32)],
        ),
        compiler_params=pltpu.CompilerParams(
            dimension_semantics=("arbitrary",),   # grid axis accumulates into acc_ref
        ),
    )(xT, tT)
    return loss[0, 0]


def _reference(outputs, targets):
    """Vectorized JAX re-implementation of the PyTorch module (well-defined cases)."""
    x = outputs.reshape(outputs.shape[0], -1).astype(jnp.float32)
    t = targets.reshape(targets.shape[0], -1).astype(jnp.float32)
    pos_m, neg_m = t, 1.0 - t
    p = pos_m.sum(-1)
    q = neg_m.sum(-1)
    neg_calib = (jax.nn.relu(1.0 + x) * neg_m).sum(-1) / jnp.maximum(q, 1.0)
    pos_calib = (jax.nn.relu(1.0 - x) * pos_m).sum(-1) / jnp.maximum(p, 1.0)
    pair = (
        jax.nn.relu(1.0 + x[:, :, None] - x[:, None, :])
        * neg_m[:, :, None]
        * pos_m[:, None, :]
    )
    l_hinge = jnp.where(p > 0, pair.sum((1, 2)) / jnp.maximum(p * q, 1.0), neg_calib)
    return jnp.mean(l_hinge + neg_calib + pos_calib)


if __name__ == "__main__":
    key = jax.random.PRNGKey(0)
    k1, k2 = jax.random.split(key)

    N, C = 6, 10  # 6 examples, 10 labels
    logits = jax.random.normal(k1, (N, C), dtype=jnp.float32)
    labels = (jax.random.uniform(k2, (N, C)) < 0.3).astype(jnp.float32)
    # guarantee at least one positive and one negative per row (the torch module
    # requires a non-empty negative set; empty-positive is handled above)
    labels = labels.at[:, 0].set(1.0).at[:, 1].set(0.0)

    loss = hinge_calibrated_ranking_loss(logits, labels)
    loss = jax.block_until_ready(loss)

    ref = _reference(logits, labels)
    assert jnp.allclose(loss, ref, rtol=1e-5, atol=1e-5), (loss, ref)

    print("KERNEL_OK")
</pallas_src>

<mosaic_0001>
module attributes {stable_mosaic.version = 11 : i64} {
  func.func @_hcr_kernel(%arg0: i32, %arg1: memref<16x128xf32, #tpu.memory_space<vmem>>, %arg2: memref<16x128xf32, #tpu.memory_space<vmem>>, %arg3: memref<1x1xf32, #tpu.memory_space<vmem>>, %arg4: memref<1x128xf32, #tpu.memory_space<vmem>>) attributes {dimension_semantics = [#tpu.dimension_semantics<arbitrary>], iteration_bounds = array<i64: 1>, scalar_prefetch = 0 : i64, scratch_operands = 1 : i64, tpu.core_type = #tpu.core_type<tc>, window_params = [{transform_indices = @transform_0, window_bounds = array<i64: 16, 128>}, {transform_indices = @transform_1, window_bounds = array<i64: 16, 128>}, {pipeline_mode = #tpu.pipeline_mode<synchronous>, transform_indices = @transform_2, window_bounds = array<i64: 1, 1>}]} {
    %c0_i32 = arith.constant 0 : i32
    %0 = arith.cmpi eq, %arg0, %c0_i32 : i32
    %1 = arith.extui %0 : i1 to i32
    %c0_i32_0 = arith.constant 0 : i32
    %2 = arith.cmpi ne, %1, %c0_i32_0 : i32
    scf.if %2 {
      %cst_44 = arith.constant 0.000000e+00 : f32
      %176 = vector.broadcast %cst_44 : f32 to vector<1x128xf32>
      %c0_45 = arith.constant 0 : index
      %c0_46 = arith.constant 0 : index
      %177 = vector.load %arg4[%c0_45, %c0_46] : memref<1x128xf32, #tpu.memory_space<vmem>>, vector<1x128xf32>
      tpu.vector_store %arg4[%c0_45, %c0_46], %176 {strides = array<i32>} : memref<1x128xf32, #tpu.memory_space<vmem>>, vector<1x128xf32>,
    } else {
    }
    %c0 = arith.constant 0 : index
    %c0_1 = arith.constant 0 : index
    %3 = vector.load %arg1[%c0, %c0_1] : memref<16x128xf32, #tpu.memory_space<vmem>>, vector<16x128xf32>
    %c0_2 = arith.constant 0 : index
    %c0_3 = arith.constant 0 : index
    %4 = vector.load %arg2[%c0_2, %c0_3] : memref<16x128xf32, #tpu.memory_space<vmem>>, vector<16x128xf32>
    %5 = tpu.iota {dimensions = array<i32: 0>} : vector<16x128xi32>
    %c10_i32 = arith.constant 10 : i32
    %6 = vector.broadcast %c10_i32 : i32 to vector<16x128xi32>
    %7 = arith.cmpi slt, %5, %6 : vector<16x128xi32>
    %8 = arith.extui %7 : vector<16x128xi1> to vector<16x128xi32>
    %9 = arith.sitofp %8 : vector<16x128xi32> to vector<16x128xf32>
    %10 = arith.mulf %4, %9 : vector<16x128xf32>
    %cst = arith.constant 1.000000e+00 : f32
    %11 = vector.broadcast %cst : f32 to vector<16x128xf32>
    %12 = arith.subf %11, %4 : vector<16x128xf32>
    %13 = arith.mulf %12, %9 : vector<16x128xf32>
    %cst_4 = arith.constant 0.000000e+00 : f32
    %14 = vector.broadcast %cst_4 : f32 to vector<16x128xf32>
    %15 = vector.extract_strided_slice %3 {offsets = [0, 0], sizes = [1, 128], strides = [1, 1]} : vector<16x128xf32> to vector<1x128xf32>
    %16 = vector.extract_strided_slice %10 {offsets = [0, 0], sizes = [1, 128], strides = [1, 1]} : vector<16x128xf32> to vector<1x128xf32>
    %cst_5 = arith.constant 1.000000e+00 : f32
    %17 = vector.broadcast %cst_5 : f32 to vector<1x128xf32>
    %18 = arith.subf %15, %17 : vector<1x128xf32>
    %19 = vector.broadcast %18 : vector<1x128xf32> to vector<16x128xf32>
    %20 = arith.subf %3, %19 : vector<16x128xf32>
    %cst_6 = arith.constant 0.000000e+00 : f32
    %21 = vector.broadcast %cst_6 : f32 to vector<16x128xf32>
    %22 = arith.maximumf %20, %21 : vector<16x128xf32>
    %23 = vector.broadcast %16 : vector<1x128xf32> to vector<16x128xf32>
    %24 = arith.mulf %23, %22 : vector<16x128xf32>
    %25 = arith.addf %14, %24 : vector<16x128xf32>
    %26 = vector.extract_strided_slice %3 {offsets = [1, 0], sizes = [1, 128], strides = [1, 1]} : vector<16x128xf32> to vector<1x128xf32>
    %27 = vector.extract_strided_slice %10 {offsets = [1, 0], sizes = [1, 128], strides = [1, 1]} : vector<16x128xf32> to vector<1x128xf32>
    %cst_7 = arith.constant 1.000000e+00 : f32
    %28 = vector.broadcast %cst_7 : f32 to vector<1x128xf32>
    %29 = arith.subf %26, %28 : vector<1x128xf32>
    %30 = vector.broadcast %29 : vector<1x128xf32> to vector<16x128xf32>
    %31 = arith.subf %3, %30 : vector<16x128xf32>
    %cst_8 = arith.constant 0.000000e+00 : f32
    %32 = vector.broadcast %cst_8 : f32 to vector<16x128xf32>
    %33 = arith.maximumf %31, %32 : vector<16x128xf32>
    %34 = vector.broadcast %27 : vector<1x128xf32> to vector<16x128xf32>
    %35 = arith.mulf %34, %33 : vector<16x128xf32>
    %36 = arith.addf %25, %35 : vector<16x128xf32>
    %37 = vector.extract_strided_slice %3 {offsets = [2, 0], sizes = [1, 128], strides = [1, 1]} : vector<16x128xf32> to vector<1x128xf32>
    %38 = vector.extract_strided_slice %10 {offsets = [2, 0], sizes = [1, 128], strides = [1, 1]} : vector<16x128xf32> to vector<1x128xf32>
    %cst_9 = arith.constant 1.000000e+00 : f32
    %39 = vector.broadcast %cst_9 : f32 to vector<1x128xf32>
    %40 = arith.subf %37, %39 : vector<1x128xf32>
    %41 = vector.broadcast %40 : vector<1x128xf32> to vector<16x128xf32>
    %42 = arith.subf %3, %41 : vector<16x128xf32>
    %cst_10 = arith.constant 0.000000e+00 : f32
    %43 = vector.broadcast %cst_10 : f32 to vector<16x128xf32>
    %44 = arith.maximumf %42, %43 : vector<16x128xf32>
    %45 = vector.broadcast %38 : vector<1x128xf32> to vector<16x128xf32>
    %46 = arith.mulf %45, %44 : vector<16x128xf32>
    %47 = arith.addf %36, %46 : vector<16x128xf32>
    %48 = vector.extract_strided_slice %3 {offsets = [3, 0], sizes = [1, 128], strides = [1, 1]} : vector<16x128xf32> to vector<1x128xf32>
    %49 = vector.extract_strided_slice %10 {offsets = [3, 0], sizes = [1, 128], strides = [1, 1]} : vector<16x128xf32> to vector<1x128xf32>
    %cst_11 = arith.constant 1.000000e+00 : f32
    %50 = vector.broadcast %cst_11 : f32 to vector<1x128xf32>
    %51 = arith.subf %48, %50 : vector<1x128xf32>
    %52 = vector.broadcast %51 : vector<1x128xf32> to vector<16x128xf32>
    %53 = arith.subf %3, %52 : vector<16x128xf32>
    %cst_12 = arith.constant 0.000000e+00 : f32
    %54 = vector.broadcast %cst_12 : f32 to vector<16x128xf32>
    %55 = arith.maximumf %53, %54 : vector<16x128xf32>
    %56 = vector.broadcast %49 : vector<1x128xf32> to vector<16x128xf32>
    %57 = arith.mulf %56, %55 : vector<16x128xf32>
    %58 = arith.addf %47, %57 : vector<16x128xf32>
    %59 = vector.extract_strided_slice %3 {offsets = [4, 0], sizes = [1, 128], strides = [1, 1]} : vector<16x128xf32> to vector<1x128xf32>
    %60 = vector.extract_strided_slice %10 {offsets = [4, 0], sizes = [1, 128], strides = [1, 1]} : vector<16x128xf32> to vector<1x128xf32>
    %cst_13 = arith.constant 1.000000e+00 : f32
    %61 = vector.broadcast %cst_13 : f32 to vector<1x128xf32>
    %62 = arith.subf %59, %61 : vector<1x128xf32>
    %63 = vector.broadcast %62 : vector<1x128xf32> to vector<16x128xf32>
    %64 = arith.subf %3, %63 : vector<16x128xf32>
    %cst_14 = arith.constant 0.000000e+00 : f32
    %65 = vector.broadcast %cst_14 : f32 to vector<16x128xf32>
    %66 = arith.maximumf %64, %65 : vector<16x128xf32>
    %67 = vector.broadcast %60 : vector<1x128xf32> to vector<16x128xf32>
    %68 = arith.mulf %67, %66 : vector<16x128xf32>
    %69 = arith.addf %58, %68 : vector<16x128xf32>
    %70 = vector.extract_strided_slice %3 {offsets = [5, 0], sizes = [1, 128], strides = [1, 1]} : vector<16x128xf32> to vector<1x128xf32>
    %71 = vector.extract_strided_slice %10 {offsets = [5, 0], sizes = [1, 128], strides = [1, 1]} : vector<16x128xf32> to vector<1x128xf32>
    %cst_15 = arith.constant 1.000000e+00 : f32
    %72 = vector.broadcast %cst_15 : f32 to vector<1x128xf32>
    %73 = arith.subf %70, %72 : vector<1x128xf32>
    %74 = vector.broadcast %73 : vector<1x128xf32> to vector<16x128xf32>
    %75 = arith.subf %3, %74 : vector<16x128xf32>
    %cst_16 = arith.constant 0.000000e+00 : f32
    %76 = vector.broadcast %cst_16 : f32 to vector<16x128xf32>
    %77 = arith.maximumf %75, %76 : vector<16x128xf32>
    %78 = vector.broadcast %71 : vector<1x128xf32> to vector<16x128xf32>
    %79 = arith.mulf %78, %77 : vector<16x128xf32>
    %80 = arith.addf %69, %79 : vector<16x128xf32>
    %81 = vector.extract_strided_slice %3 {offsets = [6, 0], sizes = [1, 128], strides = [1, 1]} : vector<16x128xf32> to vector<1x128xf32>
    %82 = vector.extract_strided_slice %10 {offsets = [6, 0], sizes = [1, 128], strides = [1, 1]} : vector<16x128xf32> to vector<1x128xf32>
    %cst_17 = arith.constant 1.000000e+00 : f32
    %83 = vector.broadcast %cst_17 : f32 to vector<1x128xf32>
    %84 = arith.subf %81, %83 : vector<1x128xf32>
    %85 = vector.broadcast %84 : vector<1x128xf32> to vector<16x128xf32>
    %86 = arith.subf %3, %85 : vector<16x128xf32>
    %cst_18 = arith.constant 0.000000e+00 : f32
    %87 = vector.broadcast %cst_18 : f32 to vector<16x128xf32>
    %88 = arith.maximumf %86, %87 : vector<16x128xf32>
    %89 = vector.broadcast %82 : vector<1x128xf32> to vector<16x128xf32>
    %90 = arith.mulf %89, %88 : vector<16x128xf32>
    %91 = arith.addf %80, %90 : vector<16x128xf32>
    %92 = vector.extract_strided_slice %3 {offsets = [7, 0], sizes = [1, 128], strides = [1, 1]} : vector<16x128xf32> to vector<1x128xf32>
    %93 = vector.extract_strided_slice %10 {offsets = [7, 0], sizes = [1, 128], strides = [1, 1]} : vector<16x128xf32> to vector<1x128xf32>
    %cst_19 = arith.constant 1.000000e+00 : f32
    %94 = vector.broadcast %cst_19 : f32 to vector<1x128xf32>
    %95 = arith.subf %92, %94 : vector<1x128xf32>
    %96 = vector.broadcast %95 : vector<1x128xf32> to vector<16x128xf32>
    %97 = arith.subf %3, %96 : vector<16x128xf32>
    %cst_20 = arith.constant 0.000000e+00 : f32
    %98 = vector.broadcast %cst_20 : f32 to vector<16x128xf32>
    %99 = arith.maximumf %97, %98 : vector<16x128xf32>
    %100 = vector.broadcast %93 : vector<1x128xf32> to vector<16x128xf32>
    %101 = arith.mulf %100, %99 : vector<16x128xf32>
    %102 = arith.addf %91, %101 : vector<16x128xf32>
    %103 = vector.extract_strided_slice %3 {offsets = [8, 0], sizes = [1, 128], strides = [1, 1]} : vector<16x128xf32> to vector<1x128xf32>
    %104 = vector.extract_strided_slice %10 {offsets = [8, 0], sizes = [1, 128], strides = [1, 1]} : vector<16x128xf32> to vector<1x128xf32>
    %cst_21 = arith.constant 1.000000e+00 : f32
    %105 = vector.broadcast %cst_21 : f32 to vector<1x128xf32>
    %106 = arith.subf %103, %105 : vector<1x128xf32>
    %107 = vector.broadcast %106 : vector<1x128xf32> to vector<16x128xf32>
    %108 = arith.subf %3, %107 : vector<16x128xf32>
    %cst_22 = arith.constant 0.000000e+00 : f32
    %109 = vector.broadcast %cst_22 : f32 to vector<16x128xf32>
    %110 = arith.maximumf %108, %109 : vector<16x128xf32>
    %111 = vector.broadcast %104 : vector<1x128xf32> to vector<16x128xf32>
    %112 = arith.mulf %111, %110 : vector<16x128xf32>
    %113 = arith.addf %102, %112 : vector<16x128xf32>
    %114 = vector.extract_strided_slice %3 {offsets = [9, 0], sizes = [1, 128], strides = [1, 1]} : vector<16x128xf32> to vector<1x128xf32>
    %115 = vector.extract_strided_slice %10 {offsets = [9, 0], sizes = [1, 128], strides = [1, 1]} : vector<16x128xf32> to vector<1x128xf32>
    %cst_23 = arith.constant 1.000000e+00 : f32
    %116 = vector.broadcast %cst_23 : f32 to vector<1x128xf32>
    %117 = arith.subf %114, %116 : vector<1x128xf32>
    %118 = vector.broadcast %117 : vector<1x128xf32> to vector<16x128xf32>
    %119 = arith.subf %3, %118 : vector<16x128xf32>
    %cst_24 = arith.constant 0.000000e+00 : f32
    %120 = vector.broadcast %cst_24 : f32 to vector<16x128xf32>
    %121 = arith.maximumf %119, %120 : vector<16x128xf32>
    %122 = vector.broadcast %115 : vector<1x128xf32> to vector<16x128xf32>
    %123 = arith.mulf %122, %121 : vector<16x128xf32>
    %124 = arith.addf %113, %123 : vector<16x128xf32>
    %125 = arith.mulf %13, %124 : vector<16x128xf32>
    %cst_25 = arith.constant dense<0.000000e+00> : vector<128xf32>
    %126 = vector.multi_reduction <add>, %125, %cst_25 [0] : vector<16x128xf32> to vector<128xf32>
    %127 = vector.shape_cast %126 : vector<128xf32> to vector<1x128xf32>
    %cst_26 = arith.constant 1.000000e+00 : f32
    %128 = vector.broadcast %cst_26 : f32 to vector<16x128xf32>
    %129 = arith.addf %128, %3 : vector<16x128xf32>
    %cst_27 = arith.constant 0.000000e+00 : f32
    %130 = vector.broadcast %cst_27 : f32 to vector<16x128xf32>
    %131 = arith.maximumf %129, %130 : vector<16x128xf32>
    %132 = arith.mulf %13, %131 : vector<16x128xf32>
    %cst_28 = arith.constant dense<0.000000e+00> : vector<128xf32>
    %133 = vector.multi_reduction <add>, %132, %cst_28 [0] : vector<16x128xf32> to vector<128xf32>
    %134 = vector.shape_cast %133 : vector<128xf32> to vector<1x128xf32>
    %cst_29 = arith.constant 1.000000e+00 : f32
    %135 = vector.broadcast %cst_29 : f32 to vector<16x128xf32>
    %136 = arith.subf %135, %3 : vector<16x128xf32>
    %cst_30 = arith.constant 0.000000e+00 : f32
    %137 = vector.broadcast %cst_30 : f32 to vector<16x128xf32>
    %138 = arith.maximumf %136, %137 : vector<16x128xf32>
    %139 = arith.mulf %10, %138 : vector<16x128xf32>
    %cst_31 = arith.constant dense<0.000000e+00> : vector<128xf32>
    %140 = vector.multi_reduction <add>, %139, %cst_31 [0] : vector<16x128xf32> to vector<128xf32>
    %141 = vector.shape_cast %140 : vector<128xf32> to vector<1x128xf32>
    %cst_32 = arith.constant dense<0.000000e+00> : vector<128xf32>
    %142 = vector.multi_reduction <add>, %10, %cst_32 [0] : vector<16x128xf32> to vector<128xf32>
    %143 = vector.shape_cast %142 : vector<128xf32> to vector<1x128xf32>
    %cst_33 = arith.constant dense<0.000000e+00> : vector<128xf32>
    %144 = vector.multi_reduction <add>, %13, %cst_33 [0] : vector<16x128xf32> to vector<128xf32>
    %145 = vector.shape_cast %144 : vector<128xf32> to vector<1x128xf32>
    %cst_34 = arith.constant 1.000000e+00 : f32
    %146 = vector.broadcast %cst_34 : f32 to vector<1x128xf32>
    %147 = arith.maximumf %145, %146 : vector<1x128xf32>
    %148 = arith.divf %134, %147 : vector<1x128xf32>
    %cst_35 = arith.constant 1.000000e+00 : f32
    %149 = vector.broadcast %cst_35 : f32 to vector<1x128xf32>
    %150 = arith.maximumf %143, %149 : vector<1x128xf32>
    %151 = arith.divf %141, %150 : vector<1x128xf32>
    %cst_36 = arith.constant 0.000000e+00 : f32
    %152 = vector.broadcast %cst_36 : f32 to vector<1x128xf32>
    %153 = arith.cmpf ogt, %143, %152 : vector<1x128xf32>
    %154 = arith.mulf %143, %145 : vector<1x128xf32>
    %cst_37 = arith.constant 1.000000e+00 : f32
    %155 = vector.broadcast %cst_37 : f32 to vector<1x128xf32>
    %156 = arith.maximumf %154, %155 : vector<1x128xf32>
    %157 = arith.divf %127, %156 : vector<1x128xf32>
    %158 = arith.select %153, %157, %148 : vector<1x128xi1>, vector<1x128xf32>
    %159 = arith.addf %158, %148 : vector<1x128xf32>
    %160 = arith.addf %159, %151 : vector<1x128xf32>
    %c128_i32 = arith.constant 128 : i32
    %161 = arith.muli %arg0, %c128_i32 : i32
    %162 = tpu.iota {dimensions = array<i32: 1>} : vector<1x128xi32>
    %163 = vector.broadcast %161 : i32 to vector<1x128xi32>
    %164 = arith.addi %163, %162 : vector<1x128xi32>
    %c6_i32 = arith.constant 6 : i32
    %165 = vector.broadcast %c6_i32 : i32 to vector<1x128xi32>
    %166 = arith.cmpi slt, %164, %165 : vector<1x128xi32>
    %167 = arith.extui %166 : vector<1x128xi1> to vector<1x128xi32>
    %168 = arith.sitofp %167 : vector<1x128xi32> to vector<1x128xf32>
    %c0_38 = arith.constant 0 : index
    %c0_39 = arith.constant 0 : index
    %169 = vector.load %arg4[%c0_38, %c0_39] : memref<1x128xf32, #tpu.memory_space<vmem>>, vector<1x128xf32>
    %170 = arith.mulf %160, %168 : vector<1x128xf32>
    %171 = arith.addf %169, %170 : vector<1x128xf32>
    %c0_40 = arith.constant 0 : index
    %c0_41 = arith.constant 0 : index
    %172 = vector.load %arg4[%c0_40, %c0_41] : memref<1x128xf32, #tpu.memory_space<vmem>>, vector<1x128xf32>
    tpu.vector_store %arg4[%c0_40, %c0_41], %171 {strides = array<i32>} : memref<1x128xf32, #tpu.memory_space<vmem>>, vector<1x128xf32>,
    %c0_i32_42 = arith.constant 0 : i32
    %173 = arith.cmpi eq, %arg0, %c0_i32_42 : i32
    %174 = arith.extui %173 : i1 to i32
    %c0_i32_43 = arith.constant 0 : i32
    %175 = arith.cmpi ne, %174, %c0_i32_43 : i32
    scf.if %175 {
      %c0_44 = arith.constant 0 : index
      %c0_45 = arith.constant 0 : index
      %176 = vector.load %arg4[%c0_44, %c0_45] : memref<1x128xf32, #tpu.memory_space<vmem>>, vector<1x128xf32>
      %177 = vector.shape_cast %176 : vector<1x128xf32> to vector<1x1x128xf32>
      %cst_46 = arith.constant dense<0.000000e+00> : vector<1xf32>
      %178 = vector.multi_reduction <add>, %177, %cst_46 [1, 2] : vector<1x1x128xf32> to vector<1xf32>
      %179 = vector.shape_cast %178 : vector<1xf32> to vector<1x1x1xf32>
      %180 = vector.extract %179[0, 0, 0] : f32 from vector<1x1x1xf32>
      %181 = vector.broadcast %180 : f32 to vector<1x1xf32>
      %cst_47 = arith.constant 6.000000e+00 : f32
      %182 = vector.broadcast %cst_47 : f32 to vector<1x1xf32>
      %183 = arith.divf %181, %182 : vector<1x1xf32>
      %c0_48 = arith.constant 0 : index
      %c0_49 = arith.constant 0 : index
      %184 = vector.load %arg3[%c0_48, %c0_49] : memref<1x1xf32, #tpu.memory_space<vmem>>, vector<1x1xf32>
      tpu.vector_store %arg3[%c0_48, %c0_49], %183 {strides = array<i32>} : memref<1x1xf32, #tpu.memory_space<vmem>>, vector<1x1xf32>,
    } else {
    }
    return
  }
  func.func @transform_0(%arg0: i32) -> (i32, i32) {
    %c0_i32 = arith.constant 0 : i32
    %c0_i32_0 = arith.constant 0 : i32
    return %c0_i32, %arg0 : i32, i32
  }
  func.func @transform_1(%arg0: i32) -> (i32, i32) {
    %c0_i32 = arith.constant 0 : i32
    %c0_i32_0 = arith.constant 0 : i32
    return %c0_i32, %arg0 : i32, i32
  }
  func.func @transform_2(%arg0: i32) -> (i32, i32) {
    %c0_i32 = arith.constant 0 : i32
    %c0_i32_0 = arith.constant 0 : i32
    %c0_i32_1 = arith.constant 0 : i32
    return %c0_i32, %c0_i32_0 : i32, i32
  }
}

</mosaic_0001>

<llo_original>
// kernel: tpu_custom_call.1
$region0: #{tpu_custom_call.1}
  #allocation0 [shape = 'u32[]', space=smem, size = 0x4, offset = 0x4, fixed_abs, tag = 'smem constant byte address 0x4 - core index']
  #allocation1 [shape = 'u32[144,128]{1,0:T(1,128)}', space=vmem, size = 0x12000, scoped, tag = 'internal scratch']
  #allocation2 [shape = 'f32[1,128]{1,0:T(1,128)}', space=vmem, size = 0x200, scoped, tag = 'scratch operand']
  %s0 = inlined_call_operand.hbm [shape: f32[16,128], index: 0, kind: input, shape index: {}]
  %s1 = inlined_call_operand.hbm [shape: f32[16,128], index: 1, kind: input, shape index: {}]
  %s2 = inlined_call_operand.hbm [shape: f32[1,1], index: 2, kind: output, shape index: {}]
  %s3 = sld [smem:[#allocation0]]
  $region34: #{tpu_custom_call.1} parent=0
    _
  %s5 = ssub.s32 1, %s3
  %s6 = scalar_select 0, %s5, %s3
  $region1: #{tpu_custom_call.1} parent=0
    #allocation3 [shape = 'u8[8192]{0}', space=vmem, size = 0x2000, scoped, tag = 'input window, operand 0, single buffered']
    #allocation4 [shape = 's32[1]{0}', space=sflag, size = 0x4, scoped, tag = 'scoped memory for tpu_custom_call.1']
    #allocation5 [shape = 's32[1]{0}', space=sflag, size = 0x4, scoped, tag = 'scoped memory for tpu_custom_call.1']
    #allocation6 [shape = 'u8[8192]{0}', space=vmem, size = 0x2000, scoped, tag = 'input window, operand 1, single buffered']
    #allocation7 [shape = 's32[1]{0}', space=sflag, size = 0x4, scoped, tag = 'scoped memory for tpu_custom_call.1']
    #allocation8 [shape = 'u8[512]{0}', space=vmem, size = 0x400, scoped, tag = 'output window, operand 0, single buffered']
    %7 = vsyncpa [#allocation4], 0
    %8 = vsyncpa [#allocation7], 0
    %9 = vsyncpa [#allocation5], 0
    // Predicated region
    $region2: #{tpu_custom_call.1} parent=1 // pred_check
      _
    $region3: #{tpu_custom_call.1} parent=1 // pred_check_branch
      %11 = sbr.rel (0) target = $region5
    $region4: #{tpu_custom_call.1} parent=1 // pred_region
      %s13 = ssub.s32 256, 256
      %14 = vsyncadd [#allocation4], %s13
      %s15 = sshll.u32 [#allocation3], 4
      %s16 = int_to_ptr.vmem [resolvable:$true] %s15
      %21 = dma.hbm_to_vmem [thread:$0]  %s0, 256, %s16, [#allocation4], 128, 128, 8
    $region5: #{tpu_custom_call.1} parent=1 // pred_fallthru
      _
    // Predicated region
    $region6: #{tpu_custom_call.1} parent=1 // pred_check
      _
    $region7: #{tpu_custom_call.1} parent=1 // pred_check_branch
      %23 = sbr.rel (0) target = $region9
    $region8: #{tpu_custom_call.1} parent=1 // pred_region
      %s25 = ssub.s32 256, 256
      %26 = vsyncadd [#allocation7], %s25
      %s27 = sshll.u32 [#allocation6], 4
      %s28 = int_to_ptr.vmem [resolvable:$true] %s27
      %33 = dma.hbm_to_vmem [thread:$0]  %s1, 256, %s28, [#allocation7], 128, 128, 8
    $region9: #{tpu_custom_call.1} parent=1 // pred_fallthru
      _
    // Predicated region
    $region10: #{tpu_custom_call.1} parent=1 // pred_check
      _
    $region11: #{tpu_custom_call.1} parent=1 // pred_check_branch
      %35 = sbr.rel (0) target = $region13
    $region12: #{tpu_custom_call.1} parent=1 // pred_region
      %36 = dma.done [#allocation4], 256
    $region13: #{tpu_custom_call.1} parent=1 // pred_fallthru
      _
    // Predicated region
    $region14: #{tpu_custom_call.1} parent=1 // pred_check
      _
    $region15: #{tpu_custom_call.1} parent=1 // pred_check_branch
      %38 = sbr.rel (0) target = $region17
    $region16: #{tpu_custom_call.1} parent=1 // pred_region
      %39 = dma.done [#allocation7], 256
    $region17: #{tpu_custom_call.1} parent=1 // pred_fallthru
      _
    %p40 = scmp.eq.s32.totalorder 0, 0
    // Predicated region
    $region18: #{tpu_custom_call.1} parent=1 // pred_check
      %p41 = pneg %p40
    $region19: #{tpu_custom_call.1} parent=1 // pred_check_branch
      %43 = sbr.rel (%p41) target = $region21
    $region20: #{tpu_custom_call.1} parent=1 // pred_region
      %44 = vst [vmem:[#allocation2] sm:$0x1] 0.0
    $region21: #{tpu_custom_call.1} parent=1 // pred_fallthru
      _
    %v45 = vld [vmem:[#allocation3] sm:$0xff]
    %v46 = vld [vmem:[#allocation3 + $0x8] sm:$0xff]
    %v47 = vld [vmem:[#allocation6] sm:$0xff]
    %v48 = vld [vmem:[#allocation6 + $0x8] sm:$0xff]
    %v49 = vlaneseq
    %v50 = vshrl.u32 %v49, 7
    %v51 = vadd.s32 %v50, 8
    %vm52 = vcmp.lt.s32.totalorder %v50, 10
    %vm53 = vcmp.lt.s32.totalorder %v51, 10
    %v54 = vsel %vm52, 1, 0
    %v55 = vsel %vm53, 1, 0
    %v56 = vcvt.s32.f32 %v54
    %v57 = vcvt.s32.f32 %v55
    %v58 = vmul.f32 %v47, %v56
    %v59 = vmul.f32 %v48, %v57
    %v60 = vsub.f32 1.0, %v47
    %v61 = vsub.f32 1.0, %v48
    %v62 = vmul.f32 %v60, %v56
    %v63 = vmul.f32 %v61, %v57
    %v64 = vsub.f32 %v45, 1.0
    %v65 = vlaneseq
    %v66 = vshrl.u32 %v65, 7
    %v67 = vsub.s32 0, %v66
    %v68 = vrot.slane %v64, %v67
    %v69 = vsub.f32 %v45, %v68
    %v70 = vsub.f32 %v46, %v68
    %v71 = vmax.f32 %v69, 0.0
    %v72 = vmax.f32 %v70, 0.0
    %v73 = vlaneseq
    %v74 = vshrl.u32 %v73, 7
    %v75 = vsub.s32 0, %v74
    %v76 = vrot.slane %v58, %v75
    %v77 = vmul.f32 %v76, %v71
    %v78 = vmul.f32 %v76, %v72
    %v79 = vadd.f32 %v77, 0.0
    %v80 = vadd.f32 %v78, 0.0
    %v81 = vlaneseq
    %v82 = vshrl.u32 %v81, 7
    %v83 = vsub.s32 1, %v82
    %v84 = vrot.slane %v64, %v83
    %v85 = vsub.f32 %v45, %v84
    %v86 = vsub.f32 %v46, %v84
    %v87 = vmax.f32 %v85, 0.0
    %v88 = vmax.f32 %v86, 0.0
    %v89 = vlaneseq
    %v90 = vshrl.u32 %v89, 7
    %v91 = vsub.s32 1, %v90
    %v92 = vrot.slane %v58, %v91
    %v93 = vmul.f32 %v92, %v87
    %v94 = vmul.f32 %v92, %v88
    %v95 = vadd.f32 %v79, %v93
    %v96 = vadd.f32 %v80, %v94
    %v97 = vlaneseq
    %v98 = vshrl.u32 %v97, 7
    %v99 = vsub.s32 2, %v98
    %v100 = vrot.slane %v64, %v99
    %v101 = vsub.f32 %v45, %v100
    %v102 = vsub.f32 %v46, %v100
    %v103 = vmax.f32 %v101, 0.0
    %v104 = vmax.f32 %v102, 0.0
    %v105 = vlaneseq
    %v106 = vshrl.u32 %v105, 7
    %v107 = vsub.s32 2, %v106
    %v108 = vrot.slane %v58, %v107
    %v109 = vmul.f32 %v108, %v103
    %v110 = vmul.f32 %v108, %v104
    %v111 = vadd.f32 %v95, %v109
    %v112 = vadd.f32 %v96, %v110
    %v113 = vlaneseq
    %v114 = vshrl.u32 %v113, 7
    %v115 = vsub.s32 3, %v114
    %v116 = vrot.slane %v64, %v115
    %v117 = vsub.f32 %v45, %v116
    %v118 = vsub.f32 %v46, %v116
    %v119 = vmax.f32 %v117, 0.0
    %v120 = vmax.f32 %v118, 0.0
    %v121 = vlaneseq
    %v122 = vshrl.u32 %v121, 7
    %v123 = vsub.s32 3, %v122
    %v124 = vrot.slane %v58, %v123
    %v125 = vmul.f32 %v124, %v119
    %v126 = vmul.f32 %v124, %v120
    %v127 = vadd.f32 %v111, %v125
    %v128 = vadd.f32 %v112, %v126
    %v129 = vlaneseq
    %v130 = vshrl.u32 %v129, 7
    %v131 = vsub.s32 4, %v130
    %v132 = vrot.slane %v64, %v131
    %v133 = vsub.f32 %v45, %v132
    %v134 = vsub.f32 %v46, %v132
    %v135 = vmax.f32 %v133, 0.0
    %v136 = vmax.f32 %v134, 0.0
    %v137 = vlaneseq
    %v138 = vshrl.u32 %v137, 7
    %v139 = vsub.s32 4, %v138
    %v140 = vrot.slane %v58, %v139
    %v141 = vmul.f32 %v140, %v135
    %v142 = vmul.f32 %v140, %v136
    %v143 = vadd.f32 %v127, %v141
    %v144 = vadd.f32 %v128, %v142
    %v145 = vlaneseq
    %v146 = vshrl.u32 %v145, 7
    %v147 = vsub.s32 5, %v146
    %v148 = vrot.slane %v64, %v147
    %v149 = vsub.f32 %v45, %v148
    %v150 = vsub.f32 %v46, %v148
    %v151 = vmax.f32 %v149, 0.0
    %v152 = vmax.f32 %v150, 0.0
    %v153 = vlaneseq
    %v154 = vshrl.u32 %v153, 7
    %v155 = vsub.s32 5, %v154
    %v156 = vrot.slane %v58, %v155
    %v157 = vmul.f32 %v156, %v151
    %v158 = vmul.f32 %v156, %v152
    %v159 = vadd.f32 %v143, %v157
    %v160 = vadd.f32 %v144, %v158
    %v161 = vlaneseq
    %v162 = vshrl.u32 %v161, 7
    %v163 = vsub.s32 6, %v162
    %v164 = vrot.slane %v64, %v163
    %v165 = vsub.f32 %v45, %v164
    %v166 = vsub.f32 %v46, %v164
    %v167 = vmax.f32 %v165, 0.0
    %v168 = vmax.f32 %v166, 0.0
    %v169 = vlaneseq
    %v170 = vshrl.u32 %v169, 7
    %v171 = vsub.s32 6, %v170
    %v172 = vrot.slane %v58, %v171
    %v173 = vmul.f32 %v172, %v167
    %v174 = vmul.f32 %v172, %v168
    %v175 = vadd.f32 %v159, %v173
    %v176 = vadd.f32 %v160, %v174
    %v177 = vlaneseq
    %v178 = vshrl.u32 %v177, 7
    %v179 = vsub.s32 7, %v178
    %v180 = vrot.slane %v64, %v179
    %v181 = vsub.f32 %v45, %v180
    %v182 = vsub.f32 %v46, %v180
    %v183 = vmax.f32 %v181, 0.0
    %v184 = vmax.f32 %v182, 0.0
    %v185 = vlaneseq
    %v186 = vshrl.u32 %v185, 7
    %v187 = vsub.s32 7, %v186
    %v188 = vrot.slane %v58, %v187
    %v189 = vmul.f32 %v188, %v183
    %v190 = vmul.f32 %v188, %v184
    %v191 = vadd.f32 %v175, %v189
    %v192 = vadd.f32 %v176, %v190
    %v193 = vsub.f32 %v46, 1.0
    %v194 = vlaneseq
    %v195 = vshrl.u32 %v194, 7
    %v196 = vsub.s32 0, %v195
    %v197 = vrot.slane %v193, %v196
    %v198 = vsub.f32 %v45, %v197
    %v199 = vsub.f32 %v46, %v197
    %v200 = vmax.f32 %v198, 0.0
    %v201 = vmax.f32 %v199, 0.0
    %v202 = vlaneseq
    %v203 = vshrl.u32 %v202, 7
    %v204 = vsub.s32 0, %v203
    %v205 = vrot.slane %v59, %v204
    %v206 = vmul.f32 %v205, %v200
    %v207 = vmul.f32 %v205, %v201
    %v208 = vadd.f32 %v191, %v206
    %v209 = vadd.f32 %v192, %v207
    %v210 = vlaneseq
    %v211 = vshrl.u32 %v210, 7
    %v212 = vsub.s32 1, %v211
    %v213 = vrot.slane %v193, %v212
    %v214 = vsub.f32 %v45, %v213
    %v215 = vsub.f32 %v46, %v213
    %v216 = vmax.f32 %v214, 0.0
    %v217 = vmax.f32 %v215, 0.0
    %v218 = vlaneseq
    %v219 = vshrl.u32 %v218, 7
    %v220 = vsub.s32 1, %v219
    %v221 = vrot.slane %v59, %v220
    %v222 = vmul.f32 %v221, %v216
    %v223 = vmul.f32 %v221, %v217
    %v224 = vadd.f32 %v208, %v222
    %v225 = vadd.f32 %v209, %v223
    %v226 = vmul.f32 %v62, %v224
    %v227 = vmul.f32 %v63, %v225
    %v228 = vadd.f32 %v226, %v227
    %v229 = vrot.slane %v228, 4
    %v230 = vadd.f32 %v228, %v229
    %v231 = vrot.slane %v230, 2
    %v232 = vadd.f32 %v230, %v231
    %v233 = vrot.slane %v232, 1
    %v234 = vadd.f32 %v232, %v233
    %v235 = vadd.f32 %v45, 1.0
    %v236 = vadd.f32 %v46, 1.0
    %v237 = vmax.f32 %v235, 0.0
    %v238 = vmax.f32 %v236, 0.0
    %v239 = vmul.f32 %v62, %v237
    %v240 = vmul.f32 %v63, %v238
    %v241 = vadd.f32 %v239, %v240
    %v242 = vrot.slane %v241, 4
    %v243 = vadd.f32 %v241, %v242
    %v244 = vrot.slane %v243, 2
    %v245 = vadd.f32 %v243, %v244
    %v246 = vrot.slane %v245, 1
    %v247 = vadd.f32 %v245, %v246
    %v248 = vsub.f32 1.0, %v45
    %v249 = vsub.f32 1.0, %v46
    %v250 = vmax.f32 %v248, 0.0
    %v251 = vmax.f32 %v249, 0.0
    %v252 = vmul.f32 %v58, %v250
    %v253 = vmul.f32 %v59, %v251
    %v254 = vadd.f32 %v252, %v253
    %v255 = vrot.slane %v254, 4
    %v256 = vadd.f32 %v254, %v255
    %v257 = vrot.slane %v256, 2
    %v258 = vadd.f32 %v256, %v257
    %v259 = vrot.slane %v258, 1
    %v260 = vadd.f32 %v258, %v259
    %v261 = vadd.f32 %v58, %v59
    %v262 = vrot.slane %v261, 4
    %v263 = vadd.f32 %v261, %v262
    %v264 = vrot.slane %v263, 2
    %v265 = vadd.f32 %v263, %v264
    %v266 = vrot.slane %v265, 1
    %v267 = vadd.f32 %v265, %v266
    %v268 = vadd.f32 %v62, %v63
    %v269 = vrot.slane %v268, 4
    %v270 = vadd.f32 %v268, %v269
    %v271 = vrot.slane %v270, 2
    %v272 = vadd.f32 %v270, %v271
    %v273 = vrot.slane %v272, 1
    %v274 = vadd.f32 %v272, %v273
    %v275 = vmax.f32 %v274, 1.0
    %v276 = vrcp.pop %v275
    %v277 = vmul.f32 %v247, %v276
    %v278 = vmax.f32 %v267, 1.0
    %v279 = vrcp.pop %v278
    %v280 = vmul.f32 %v260, %v279
    %vm281 = vcmp.gt.f32.partialorder %v267, 0.0
    %v282 = vmul.f32 %v267, %v274
    %v283 = vmax.f32 %v282, 1.0
    %v284 = vrcp.pop %v283
    %v285 = vmul.f32 %v234, %v284
    %v286 = vsel %vm281, %v285, %v277
    %v287 = vadd.f32 %v286, %v277
    %v288 = vadd.f32 %v287, %v280
    %s289 = smul.u32 0, 128
    %v290 = vlaneseq
    %v291 = vand.u32 %v290, 127
    %v292 = vstv %s289
    %v293 = vadd.s32 %v292, %v291
    %vm294 = vcmp.lt.s32.totalorder %v293, 6
    %v295 = vsel %vm294, 1, 0
    %v296 = vcvt.s32.f32 %v295
    %v297 = vld [vmem:[#allocation2] sm:$0x1]
    %v298 = vmul.f32 %v288, %v296
    %v299 = vadd.f32 %v297, %v298
    %300 = vst [vmem:[#allocation2] sm:$0x1] %v299
    // Predicated region
    $region22: #{tpu_custom_call.1} parent=1 // pred_check
      %p301 = pneg %p40
    $region23: #{tpu_custom_call.1} parent=1 // pred_check_branch
      %303 = sbr.rel (%p301) target = $region25
    $region24: #{tpu_custom_call.1} parent=1 // pred_region
      %v304 = vld [vmem:[#allocation2] sm:$0x1]
      %vm305 = vcmask 1040384
      %v306 = vsel %vm305, %v304, 0.0
      %307 = vadd.xlane.f32.xlu0 %v306
      %v308 = vpop.xlane.xlu0 %307
      %v309 = vrot.slane %v308, 4
      %v310 = vadd.f32 %v308, %v309
      %v311 = vrot.slane %v310, 2
      %v312 = vadd.f32 %v310, %v311
      %v313 = vrot.slane %v312, 1
      %v314 = vadd.f32 %v312, %v313
      %s315 = vtos %v314
      %v316 = vstv %s315
      %v317 = vrcp.pop 6.0
      %v318 = vmul.f32 %v316, %v317
      %vm319 = vcmask 0
      %320 = vst.msk [vmem:[#allocation8] sm:$0x1] %vm319, %v318
    $region25: #{tpu_custom_call.1} parent=1 // pred_fallthru
      _
    // Predicated region
    $region26: #{tpu_custom_call.1} parent=1 // pred_check
      _
    $region27: #{tpu_custom_call.1} parent=1 // pred_check_branch
      %322 = sbr.rel (0) target = $region29
    $region28: #{tpu_custom_call.1} parent=1 // pred_region
      %s324 = ssub.s32 16, 16
      %325 = vsyncadd [#allocation5], %s324
      %s327 = sshll.u32 [#allocation8], 4
      %s328 = int_to_ptr.vmem [resolvable:$true] %s327
      %330 = dma.vmem_to_hbm [thread:$0]  %s328, 16, %s2, [#allocation5]
    $region29: #{tpu_custom_call.1} parent=1 // pred_fallthru
      _
    // Predicated region
    $region30: #{tpu_custom_call.1} parent=1 // pred_check
      _
    $region31: #{tpu_custom_call.1} parent=1 // pred_check_branch
      %332 = sbr.rel (0) target = $region33
    $region32: #{tpu_custom_call.1} parent=1 // pred_region
      %333 = dma.done [#allocation5], 16
    $region33: #{tpu_custom_call.1} parent=1 // pred_fallthru
      _
    %334 = vsyncpa [#allocation4], 1
    %335 = vsyncpa [#allocation7], 1
    %336 = vsyncpa [#allocation5], 1

</llo_original>
